<compile_context>
chip_gen: v7x
topology: tpu7x:2x2x1
jax: 0.10.0
libtpu: 0.0.40
codegen_flags: <defaults>
</compile_context>

<pallas_src>
import jax
import jax.numpy as jnp
import numpy as np
from jax.experimental import pallas as pl
from jax.experimental.pallas import tpu as pltpu


# --------------------------------------------------------------------------- #
# Kernel: one grid step = (TT core c, sample k, neuron block nb).              #
# --------------------------------------------------------------------------- #
def _dse_slab_kernel(l_ref, z_ref, o_ref):
    """l_ref: (1,1,1,(Dp+1)*T, bn)  row side.  Row d*T+t, lane j holds
              sx[j,t,d] = x/lengthscale; row Dp*T+t holds
              qbx[j,t] = sum_d ((x-beta)/lengthscale_beta)^2.
       z_ref: (1,1,1, Dp+1, bn*T)   column side.  Row d, lane j*T+s holds
              sz[j,s,d]; row Dp holds qbz[j,s].
       o_ref: (1,1,1, T, bn*T)      o[t, j*T+s] = k_j(x_t, z_s)."""
    Dp = z_ref.shape[3] - 1
    bn = l_ref.shape[4]
    T = o_ref.shape[3]
    M = o_ref.shape[4]                       # = bn * T (lane-dense slab width)

    l = l_ref[0, 0, 0]                       # ((Dp+1)*T, bn)
    zc = z_ref[0, 0, 0]                      # (Dp+1, M)

    # 0/1 block-selection matrix  sel[j, j'*T + s] = (j == j').  One MXU matmul
    # expands every row-side (T, bn) quantity into its lane-dense (T, bn*T) form
    # (per-neuron lane blocks), replacing per-neuron batched einsums/transposes.
    lane = jax.lax.broadcasted_iota(jnp.int32, (bn, M), 1)
    sub = jax.lax.broadcasted_iota(jnp.int32, (bn, M), 0)
    sel = ((lane >= sub * T) & (lane < (sub + 1) * T)).astype(jnp.float32)

    ex = jnp.dot(l, sel, preferred_element_type=jnp.float32)   # ((Dp+1)*T, M)

    # Squared-distance form: arg = sum_d (sx_d - sz_d)^2 + qbx + qbz   (>= 0).
    acc = ex[Dp * T:(Dp + 1) * T, :] + zc[Dp:Dp + 1, :]   # qbx_expanded + qbz_bcast
    for d in range(Dp):                                   # static unroll, D is small
        diff = ex[d * T:(d + 1) * T, :] - zc[d:d + 1, :]
        acc = acc + diff * diff

    o_ref[0, 0, 0] = jnp.exp(-0.5 * acc)                  # one EUP pass, one full-lane store


# --------------------------------------------------------------------------- #
# Wrapper: packing, block-size choice, pallas_call, unpacking.                 #
# --------------------------------------------------------------------------- #
def _vmem_budget_bytes():
    try:
        cap = getattr(pltpu.get_tpu_info(), "vmem_capacity_bytes", None)
        if cap:
            return max(4 << 20, int(cap) // 4)   # generation-aware (v7x: 64 MiB phys)
    except Exception:
        pass
    return 16 << 20


def _pick_bn(N, T, Dp, budget=None):
    """Neurons per grid step: prefer covering all of N; otherwise the largest divisor
    whose slab lane width bn*T is a multiple of 128 (unmasked full-lane stores)."""
    if budget is None:
        budget = _vmem_budget_bytes()

    def fits(bn):
        lrow = (Dp + 1) * T * max(bn, 128) * 4          # lane-padded in VMEM
        zcol = max(Dp + 1, 8) * bn * T * 4              # sublane-padded
        out = T * bn * T * 4
        return 2 * (lrow + zcol + out) <= budget        # double-buffered

    cands = [N] + sorted([b for b in range(1, N) if N % b == 0 and (b * T) % 128 == 0],
                         reverse=True)
    for bn in cands:
        if fits(bn):
            return bn
    return cands[-1]


def _pack_core(Xc, Zc, lengthscale, beta, lengthscale_beta, Dp, bn):
    """Per-core layout packing (pure XLA, O(K*N*T*D)): scaling by the per-neuron
    lengthscales, beta 'self' reductions and row/column slab layouts."""
    K, N, T, D = Xc.shape
    NB = N // bn
    ls = lengthscale.astype(jnp.float32)[None, :, None, :]        # (1,N,1,D)
    bt = beta.astype(jnp.float32).reshape(1, 1, 1, D)
    lb = lengthscale_beta.astype(jnp.float32).reshape(1, 1, 1, D)

    sX = Xc / ls
    sZ = Zc / ls
    qbx = jnp.sum(((Xc - bt) / lb) ** 2, axis=-1)                 # (K,N,T)
    qbz = jnp.sum(((Zc - bt) / lb) ** 2, axis=-1)                 # (K,N,T)

    if D < Dp:                                                    # pad to common Dp
        pad = [(0, 0)] * 3 + [(0, Dp - D)]                        # zeros contribute 0
        sX = jnp.pad(sX, pad)
        sZ = jnp.pad(sZ, pad)

    # row side: (K, NB, (Dp+1)*T, bn), rows d*T+t, lanes j (neuron-in-block)
    sx_r = sX.reshape(K, NB, bn, T, Dp).transpose(0, 1, 4, 3, 2)          # (K,NB,Dp,T,bn)
    qbx_r = qbx.reshape(K, NB, bn, T).transpose(0, 1, 3, 2)[:, :, None]   # (K,NB,1,T,bn)
    lrow = jnp.concatenate([sx_r, qbx_r], axis=2).reshape(K, NB, (Dp + 1) * T, bn)

    # column side: (K, NB, Dp+1, bn*T), row d, lane j*T+s
    sz_c = sZ.reshape(K, NB, bn, T, Dp).transpose(0, 1, 4, 2, 3)          # (K,NB,Dp,bn,T)
    qbz_c = qbz.reshape(K, NB, bn, T)[:, :, None]                         # (K,NB,1,bn,T)
    zcol = jnp.concatenate([sz_c, qbz_c], axis=2).reshape(K, NB, Dp + 1, bn * T)
    return lrow, zcol


def ktt_forward(X, Z, params_list, track_dims_list, diag=False, bn=None):
    """KTT_kernel.forward: per TT grid dimension, slice the tracked dims, apply the
    DSE sub-kernel and insert the core-rank axis.  Returns the list of TT cores,
    each (1, 1, 1, K, N, T, T)."""
    if diag:
        raise NotImplementedError("diag=True branch not implemented")
    # TODO(synk): linalg.general_matrix / linalg.TT_matrix container bookkeeping has
    # no clean Pallas equivalent; the raw TT cores are returned instead.
    if Z is None:
        Z = X
    X = X.astype(jnp.float32)
    Z = Z.astype(jnp.float32)
    K, N, T, _ = X.shape
    C = len(track_dims_list)
    Dp = max(len(td) for td in track_dims_list)
    if bn is None:
        bn = _pick_bn(N, T, Dp)
    assert N % bn == 0, (N, bn)
    NB = N // bn
    M = bn * T

    lrows, zcols = [], []
    for (ls, beta, lsb), td in zip(params_list, track_dims_list):
        idx = jnp.asarray(td)
        lrow, zcol = _pack_core(X[..., idx], Z[..., idx], ls, beta, lsb, Dp, bn)
        lrows.append(lrow)
        zcols.append(zcol)
    lrow_all = jnp.stack(lrows, axis=0)        # (C, K, NB, (Dp+1)*T, bn)
    zcol_all = jnp.stack(zcols, axis=0)        # (C, K, NB, Dp+1, bn*T)

    out = pl.pallas_call(
        _dse_slab_kernel,
        out_shape=jax.ShapeDtypeStruct((C, K, NB, T, M), jnp.float32),
        grid_spec=pltpu.PrefetchScalarGridSpec(
            num_scalar_prefetch=0,
            grid=(C, K, NB),
            in_specs=[
                pl.BlockSpec((1, 1, 1, (Dp + 1) * T, bn),
                             lambda c, k, nb: (c, k, nb, 0, 0)),
                pl.BlockSpec((1, 1, 1, Dp + 1, M),
                             lambda c, k, nb: (c, k, nb, 0, 0)),
            ],
            out_specs=pl.BlockSpec((1, 1, 1, T, M),
                                   lambda c, k, nb: (c, k, nb, 0, 0)),
        ),
        compiler_params=pltpu.CompilerParams(
            dimension_semantics=("parallel", "parallel", "parallel")),
    )(lrow_all, zcol_all)

    # (C, K, NB, T, bn*T) -> per core (1, 1, 1, K, N, T, T)  (layout plumbing only).
    cores = []
    for c in range(C):
        slab = out[c].reshape(K, NB, T, bn, T).transpose(0, 1, 3, 2, 4)
        cores.append(slab.reshape(K, N, T, T)[None, None, None])
    return cores


def dse_reference(X, Z, lengthscale, beta, lengthscale_beta):
    """Pure-JAX transcription of the PyTorch DSE sub-kernel forward (diag=False)."""
    ls = lengthscale[None, :, None, :]                               # (1, N, 1, D)
    lsb6 = lengthscale_beta.reshape(1, 1, 1, 1, 1, -1)               # (1,1,1,1,1,D)
    sX = X / ls
    sZ = Z / ls
    X2 = (sX ** 2).sum(-1, keepdims=True)                            # (K,N,T,1)
    Z2 = (sZ ** 2).sum(-1, keepdims=True)                            # (K,N,T,1)
    XZ = jnp.einsum('kntd,knsd->knts', sX, sZ)                       # (K,N,T,T)
    r2 = X2 - 2.0 * XZ + jnp.swapaxes(Z2, -1, -2)
    dX = (((X - beta) / lsb6) ** 2).sum(-1)                          # (1,1,K,N,T)
    dZ = (((Z - beta) / lsb6) ** 2).sum(-1)
    return jnp.exp(-0.5 * (r2 + dX[..., None] + dZ[..., None, :]))   # (1,1,K,N,T,T)


if __name__ == "__main__":
    key = jax.random.PRNGKey(0)
    K, N, T = 2, 16, 16                      # samples, neurons, timesteps
    track_dims_list = [[0, 1], [2, 3]]       # two TT grid dimensions, D=2 each
    Dtot = sum(len(td) for td in track_dims_list)

    keys = jax.random.split(key, 3 + 3 * len(track_dims_list))
    X = jax.random.normal(keys[0], (K, N, T, Dtot), dtype=jnp.float32)
    Z = jax.random.normal(keys[1], (K, N, T, Dtot), dtype=jnp.float32)

    # Deterministic, positive hyperparameters per sub-kernel ('exp' link => pass-through).
    params = []
    for i, td in enumerate(track_dims_list):
        D = len(td)
        ls = jnp.exp(0.3 * jax.random.normal(keys[3 + 3 * i], (N, D), dtype=jnp.float32))
        beta = 0.5 * jax.random.normal(keys[4 + 3 * i], (1, D), dtype=jnp.float32)
        lsb = jnp.exp(0.3 * jax.random.normal(keys[5 + 3 * i], (1, D), dtype=jnp.float32)) + 1.0
        params.append((ls, beta, lsb))

    cores = ktt_forward(X, Z, params, track_dims_list)
    cores = jax.block_until_ready(cores)

    for (ls, beta, lsb), td, core in zip(params, track_dims_list, cores):
        ref = dse_reference(X[..., jnp.asarray(td)], Z[..., jnp.asarray(td)],
                            ls, beta, lsb)[:, :, None, ...]
        np.testing.assert_allclose(np.asarray(core), np.asarray(ref), rtol=1e-5, atol=1e-5)

    print("KERNEL_OK")
</pallas_src>

<mosaic_0001>
module attributes {stable_mosaic.version = 11 : i64} {
  func.func @_dse_slab_kernel(%arg0: i32, %arg1: i32, %arg2: i32, %arg3: memref<1x1x1x48x16xf32, #tpu.memory_space<vmem>>, %arg4: memref<1x1x1x3x256xf32, #tpu.memory_space<vmem>>, %arg5: memref<1x1x1x16x256xf32, #tpu.memory_space<vmem>>) attributes {dimension_semantics = [#tpu.dimension_semantics<parallel>, #tpu.dimension_semantics<parallel>, #tpu.dimension_semantics<parallel>], iteration_bounds = array<i64: 2, 2, 1>, scalar_prefetch = 0 : i64, scratch_operands = 0 : i64, tpu.core_type = #tpu.core_type<tc>, window_params = [{transform_indices = @transform_0, window_bounds = array<i64: 1, 1, 1, 48, 16>}, {transform_indices = @transform_1, window_bounds = array<i64: 1, 1, 1, 3, 256>}, {transform_indices = @transform_2, window_bounds = array<i64: 1, 1, 1, 16, 256>}]} {
    %c0 = arith.constant 0 : index
    %c0_0 = arith.constant 0 : index
    %c0_1 = arith.constant 0 : index
    %c0_2 = arith.constant 0 : index
    %c0_3 = arith.constant 0 : index
    %0 = vector.load %arg3[%c0, %c0_0, %c0_1, %c0_2, %c0_3] : memref<1x1x1x48x16xf32, #tpu.memory_space<vmem>>, vector<1x1x1x48x16xf32>
    %1 = vector.shape_cast %0 : vector<1x1x1x48x16xf32> to vector<48x16xf32>
    %c0_4 = arith.constant 0 : index
    %c0_5 = arith.constant 0 : index
    %c0_6 = arith.constant 0 : index
    %c0_7 = arith.constant 0 : index
    %c0_8 = arith.constant 0 : index
    %2 = vector.load %arg4[%c0_4, %c0_5, %c0_6, %c0_7, %c0_8] : memref<1x1x1x3x256xf32, #tpu.memory_space<vmem>>, vector<1x1x1x3x256xf32>
    %3 = vector.shape_cast %2 : vector<1x1x1x3x256xf32> to vector<3x256xf32>
    %4 = tpu.iota {dimensions = array<i32: 1>} : vector<16x256xi32>
    %5 = tpu.iota {dimensions = array<i32: 0>} : vector<16x256xi32>
    %c16_i32 = arith.constant 16 : i32
    %6 = vector.broadcast %c16_i32 : i32 to vector<16x256xi32>
    %7 = arith.muli %5, %6 : vector<16x256xi32>
    %8 = arith.cmpi sge, %4, %7 : vector<16x256xi32>
    %c1_i32 = arith.constant 1 : i32
    %9 = vector.broadcast %c1_i32 : i32 to vector<16x256xi32>
    %10 = arith.addi %5, %9 : vector<16x256xi32>
    %c16_i32_9 = arith.constant 16 : i32
    %11 = vector.broadcast %c16_i32_9 : i32 to vector<16x256xi32>
    %12 = arith.muli %10, %11 : vector<16x256xi32>
    %13 = arith.cmpi slt, %4, %12 : vector<16x256xi32>
    %14 = arith.andi %8, %13 : vector<16x256xi1>
    %15 = arith.extui %14 : vector<16x256xi1> to vector<16x256xi32>
    %16 = arith.sitofp %15 : vector<16x256xi32> to vector<16x256xf32>
    %cst = arith.constant dense<0.000000e+00> : vector<48x256xf32>
    %17 = tpu.matmul %1, %16, %cst {dimension_numbers = #tpu.dot_dimension_numbers<[1], [0], [0], [1], [0, 0, 1, 1], [], []>} : vector<48x16xf32>, vector<16x256xf32>, vector<48x256xf32> -> vector<48x256xf32>
    %18 = vector.extract_strided_slice %17 {offsets = [32, 0], sizes = [16, 256], strides = [1, 1]} : vector<48x256xf32> to vector<16x256xf32>
    %19 = vector.extract_strided_slice %3 {offsets = [2, 0], sizes = [1, 256], strides = [1, 1]} : vector<3x256xf32> to vector<1x256xf32>
    %20 = vector.broadcast %19 : vector<1x256xf32> to vector<16x256xf32>
    %21 = arith.addf %18, %20 : vector<16x256xf32>
    %22 = vector.extract_strided_slice %17 {offsets = [0, 0], sizes = [16, 256], strides = [1, 1]} : vector<48x256xf32> to vector<16x256xf32>
    %23 = vector.extract_strided_slice %3 {offsets = [0, 0], sizes = [1, 256], strides = [1, 1]} : vector<3x256xf32> to vector<1x256xf32>
    %24 = vector.broadcast %23 : vector<1x256xf32> to vector<16x256xf32>
    %25 = arith.subf %22, %24 : vector<16x256xf32>
    %26 = arith.mulf %25, %25 : vector<16x256xf32>
    %27 = arith.addf %21, %26 : vector<16x256xf32>
    %28 = vector.extract_strided_slice %17 {offsets = [16, 0], sizes = [16, 256], strides = [1, 1]} : vector<48x256xf32> to vector<16x256xf32>
    %29 = vector.extract_strided_slice %3 {offsets = [1, 0], sizes = [1, 256], strides = [1, 1]} : vector<3x256xf32> to vector<1x256xf32>
    %30 = vector.broadcast %29 : vector<1x256xf32> to vector<16x256xf32>
    %31 = arith.subf %28, %30 : vector<16x256xf32>
    %32 = arith.mulf %31, %31 : vector<16x256xf32>
    %33 = arith.addf %27, %32 : vector<16x256xf32>
    %cst_10 = arith.constant -5.000000e-01 : f32
    %34 = vector.broadcast %cst_10 : f32 to vector<16x256xf32>
    %35 = arith.mulf %34, %33 : vector<16x256xf32>
    %36 = math.exp %35 : vector<16x256xf32>
    %c0_11 = arith.constant 0 : index
    %c0_12 = arith.constant 0 : index
    %c0_13 = arith.constant 0 : index
    %c0_14 = arith.constant 0 : index
    %c0_15 = arith.constant 0 : index
    %37 = vector.load %arg5[%c0_11, %c0_12, %c0_13, %c0_14, %c0_15] : memref<1x1x1x16x256xf32, #tpu.memory_space<vmem>>, vector<1x1x1x16x256xf32>
    %38 = vector.shape_cast %37 : vector<1x1x1x16x256xf32> to vector<16x256xf32>
    %39 = vector.shape_cast %36 : vector<16x256xf32> to vector<1x1x1x16x256xf32>
    tpu.vector_store %arg5[%c0_11, %c0_12, %c0_13, %c0_14, %c0_15], %39 {strides = array<i32>} : memref<1x1x1x16x256xf32, #tpu.memory_space<vmem>>, vector<1x1x1x16x256xf32>,
    return
  }
  func.func @transform_0(%arg0: i32, %arg1: i32, %arg2: i32) -> (i32, i32, i32, i32, i32) {
    %c0_i32 = arith.constant 0 : i32
    %c0_i32_0 = arith.constant 0 : i32
    %c0_i32_1 = arith.constant 0 : i32
    return %arg0, %arg1, %arg2, %c0_i32, %c0_i32_0 : i32, i32, i32, i32, i32
  }
  func.func @transform_1(%arg0: i32, %arg1: i32, %arg2: i32) -> (i32, i32, i32, i32, i32) {
    %c0_i32 = arith.constant 0 : i32
    %c0_i32_0 = arith.constant 0 : i32
    %c0_i32_1 = arith.constant 0 : i32
    return %arg0, %arg1, %arg2, %c0_i32, %c0_i32_0 : i32, i32, i32, i32, i32
  }
  func.func @transform_2(%arg0: i32, %arg1: i32, %arg2: i32) -> (i32, i32, i32, i32, i32) {
    %c0_i32 = arith.constant 0 : i32
    %c0_i32_0 = arith.constant 0 : i32
    %c0_i32_1 = arith.constant 0 : i32
    return %arg0, %arg1, %arg2, %c0_i32, %c0_i32_0 : i32, i32, i32, i32, i32
  }
}

</mosaic_0001>

<llo_original>
// kernel: tpu_custom_call.1
$region0: #{tpu_custom_call.1}
  #allocation0 [shape = 'u32[]', space=smem, size = 0x4, offset = 0x4, fixed_abs, tag = 'smem constant byte address 0x4 - core index']
  #allocation1 [shape = 'u32[144,128]{1,0:T(1,128)}', space=vmem, size = 0x12000, scoped, tag = 'internal scratch']
  %s0 = inlined_call_operand.vmem [shape: f32[2,2,1,48,16], index: 0, kind: input, shape index: {}]
  %s1 = inlined_call_operand.vmem [shape: f32[2,2,1,3,256], index: 1, kind: input, shape index: {}]
  %s2 = inlined_call_operand.hbm [shape: f32[2,2,1,16,256], index: 2, kind: output, shape index: {}]
  %s3 = sld [smem:[#allocation0]]
  $region41: #{tpu_custom_call.1} parent=0
    _
  %s5 = ssub.s32 1, %s3
  %s6 = scalar_select 0, %s5, %s3
  $region1: #{tpu_custom_call.1} parent=0
    #allocation2 [shape = 'u8[32768]{0}', space=vmem, size = 0x8000, scoped, tag = 'output window, operand 0']
    #allocation3 [shape = 's32[2]{0}', space=sflag, size = 0x8, scoped, tag = 'scoped memory for tpu_custom_call.1']
    %7 = vsyncpa [#allocation3], 0
    %s8 = scalar_lea.sflag [#allocation3], 1
    %9 = vsyncpa %s8, 0
    loop: start=0, step=1, limit=6
    $region2: #{tpu_custom_call.1} parent=1 // loop_pre_header
      _
    $region3: #{tpu_custom_call.1} parent=1 // loop_header
      %s11 = sphi 0, %s15
      %p12 = scmp.ge.s32.totalorder %s11, 6
      %s18 = sphi 0, %s37
      %s19 = sphi 0, %s33
      %s20 = sphi 0, %s29
      %s21 = sphi 0, %s18
      %s22 = sphi 0, %s19
      %s23 = sphi 0, %s20
      %s24 = sphi 0, %s21
      %s25 = sphi 0, %s22
      %s26 = sphi 0, %s23
      %s44 = sphi 0, %s46
      %s47 = sphi 0, %s44
      %s48 = sphi 0, %s47
      %s64 = sphi 0, %s48
      %s74 = sphi 0, %s76
      %s77 = sphi 0, %s74
      %s78 = sphi 0, %s77
      %s94 = sphi 0, %s78
      %s104 = sphi 0, %s106
      %s107 = sphi 0, %s104
      %s108 = sphi 0, %s107
      %s124 = sphi 0, %s108
    $region4: #{tpu_custom_call.1} parent=1 // loop_header_branch
      %14 = sbr.rel (%p12) target = $region8
    $region5: #{tpu_custom_call.1} parent=1 // loop_body
      %s16 = ssub.s32 %s11, 1
      %s17 = ssub.s32 %s11, 2
      %s27 = sadd.s32 1, %s20
      %p28 = scmp.ge.s32.totalorder %s27, 1
      %s29 = scalar_select %p28, 0, %s27
      %s30 = sadd.s32 1, %s19
      %s31 = scalar_select %p28, %s30, %s19
      %p32 = scmp.ge.s32.totalorder %s31, 2
      %s33 = scalar_select %p32, 0, %s31
      %s34 = sadd.s32 1, %s18
      %s35 = scalar_select %p32, %s34, %s18
      %p36 = scmp.ge.s32.totalorder %s35, 2
      %s37 = scalar_select %p36, 0, %s35
      %s38 = ssub.s32 %s18, %s37
      %s39 = ssub.s32 %s19, %s33
      %s40 = sor.u32 %s38, %s39
      %s41 = ssub.s32 %s20, %s29
      %s42 = sor.u32 %s40, %s41
      %p43 = scmp.eq.s32.totalorder %s42, 0
      %s45 = sadd.s32 %s44, 1
      %s46 = scalar_select %p43, %s44, %s45
      %p49 = pneg %p43
      %p50 = scmp.eq.s32.totalorder %s11, 3
      %p51 = por %p49, %p50
      %p52 = scmp.ne.s32.totalorder %s44, %s47
      %p53 = scmp.eq.s32.totalorder %s11, 0
      %p54 = por %p52, %p53
      %p55 = scmp.ne.s32.totalorder %s44, %s47
      %p56 = scmp.eq.s32.totalorder %s16, 3
      %p57 = por %p55, %p56
      %p58 = scmp.ne.s32.totalorder %s47, %s48
      %p59 = scmp.eq.s32.totalorder %s16, 0
      %p60 = por %p58, %p59
      %p61 = scmp.ne.s32.totalorder %s47, %s48
      %p62 = scmp.eq.s32.totalorder %s17, 3
      %p63 = por %p61, %p62
      %p65 = scmp.ne.s32.totalorder %s48, %s64
      %p66 = scmp.eq.s32.totalorder %s17, 0
      %p67 = por %p65, %p66
      %s68 = ssub.s32 %s18, %s37
      %s69 = ssub.s32 %s19, %s33
      %s70 = sor.u32 %s68, %s69
      %s71 = ssub.s32 %s20, %s29
      %s72 = sor.u32 %s70, %s71
      %p73 = scmp.eq.s32.totalorder %s72, 0
      %s75 = sadd.s32 %s74, 1
      %s76 = scalar_select %p73, %s74, %s75
      %p79 = pneg %p73
      %p80 = scmp.eq.s32.totalorder %s11, 3
      %p81 = por %p79, %p80
      %p82 = scmp.ne.s32.totalorder %s74, %s77
      %p83 = scmp.eq.s32.totalorder %s11, 0
      %p84 = por %p82, %p83
      %p85 = scmp.ne.s32.totalorder %s74, %s77
      %p86 = scmp.eq.s32.totalorder %s16, 3
      %p87 = por %p85, %p86
      %p88 = scmp.ne.s32.totalorder %s77, %s78
      %p89 = scmp.eq.s32.totalorder %s16, 0
      %p90 = por %p88, %p89
      %p91 = scmp.ne.s32.totalorder %s77, %s78
      %p92 = scmp.eq.s32.totalorder %s17, 3
      %p93 = por %p91, %p92
      %p95 = scmp.ne.s32.totalorder %s78, %s94
      %p96 = scmp.eq.s32.totalorder %s17, 0
      %p97 = por %p95, %p96
      %s98 = ssub.s32 %s18, %s37
      %s99 = ssub.s32 %s19, %s33
      %s100 = sor.u32 %s98, %s99
      %s101 = ssub.s32 %s20, %s29
      %s102 = sor.u32 %s100, %s101
      %p103 = scmp.eq.s32.totalorder %s102, 0
      %s105 = sadd.s32 %s104, 1
      %s106 = scalar_select %p103, %s104, %s105
      %p109 = pneg %p103
      %p110 = scmp.eq.s32.totalorder %s11, 3
      %p111 = por %p109, %p110
      %p112 = scmp.ne.s32.totalorder %s104, %s107
      %p113 = scmp.eq.s32.totalorder %s11, 0
      %p114 = por %p112, %p113
      %p115 = scmp.ne.s32.totalorder %s104, %s107
      %p116 = scmp.eq.s32.totalorder %s16, 3
      %p117 = por %p115, %p116
      %p118 = scmp.ne.s32.totalorder %s107, %s108
      %p119 = scmp.eq.s32.totalorder %s16, 0
      %p120 = por %p118, %p119
      %p121 = scmp.ne.s32.totalorder %s107, %s108
      %p122 = scmp.eq.s32.totalorder %s17, 3
      %p123 = por %p121, %p122
      %p125 = scmp.ne.s32.totalorder %s108, %s124
      %p126 = scmp.eq.s32.totalorder %s17, 0
      %p127 = por %p125, %p126
      %p128 = scmp.le.s32.totalorder 1, %s11
      %p129 = scmp.lt.s32.totalorder %s11, 5
      %p130 = pnand %p128, %p129
      %p131 = pneg %p130
      // Predicated region
      $region9: #{tpu_custom_call.1} parent=5 // pred_check
        _
      $region10: #{tpu_custom_call.1} parent=5 // pred_check_branch
        %133 = sbr.rel (%p130) target = $region12
      $region11: #{tpu_custom_call.1} parent=5 // pred_region
        %s134 = ssub.s32 %s11, 1
      $region12: #{tpu_custom_call.1} parent=5 // pred_fallthru
        _
      %p135 = scmp.lt.s32.totalorder %s11, 4
      // Predicated region
      $region13: #{tpu_custom_call.1} parent=5 // pred_check
        %p136 = pneg %p135
      $region14: #{tpu_custom_call.1} parent=5 // pred_check_branch
        %138 = sbr.rel (%p136) target = $region16
      $region15: #{tpu_custom_call.1} parent=5 // pred_region
        // Predicated region
        $region17: #{tpu_custom_call.1} parent=15 // pred_check
          %p139 = pneg %p54
        $region18: #{tpu_custom_call.1} parent=15 // pred_check_branch
          %141 = sbr.rel (%p139) target = $region20
        $region19: #{tpu_custom_call.1} parent=15 // pred_region
          %p142 = scmp.lt.s32.totalorder %s18, 1
          %s143 = scalar_select %p142, %s18, 1
          %p144 = scmp.lt.s32.totalorder %s19, 1
          %s145 = scalar_select %p144, %s19, 1
          %p146 = scmp.lt.s32.totalorder %s20, 0
          %s147 = scalar_select %p146, %s20, 0
          %s148 = smul.addr %s147, 6
          %s149 = smul.addr %s145, 6
          %s150 = sadd.s32 %s148, %s149
          %s151 = smul.addr %s143, 12
          %s152 = sadd.s32 %s150, %s151
          %s153 = smul.addr %s152, 8
          %s154 = scalar_lea.vmem %s0, %s153
        $region20: #{tpu_custom_call.1} parent=15 // pred_fallthru
          _
        // Predicated region
        $region21: #{tpu_custom_call.1} parent=15 // pred_check
          %p155 = pneg %p84
        $region22: #{tpu_custom_call.1} parent=15 // pred_check_branch
          %157 = sbr.rel (%p155) target = $region24
        $region23: #{tpu_custom_call.1} parent=15 // pred_region
          %p158 = scmp.lt.s32.totalorder %s18, 1
          %s159 = scalar_select %p158, %s18, 1
          %p160 = scmp.lt.s32.totalorder %s19, 1
          %s161 = scalar_select %p160, %s19, 1
          %p162 = scmp.lt.s32.totalorder %s20, 0
          %s163 = scalar_select %p162, %s20, 0
          %s164 = smul.addr %s163, 2
          %s165 = smul.addr %s161, 2
          %s166 = sadd.s32 %s164, %s165
          %s167 = smul.addr %s159, 4
          %s168 = sadd.s32 %s166, %s167
          %s169 = smul.addr %s168, 4
          %s170 = scalar_lea.vmem %s1, %s169
        $region24: #{tpu_custom_call.1} parent=15 // pred_fallthru
          _
      $region16: #{tpu_custom_call.1} parent=5 // pred_fallthru
        _
      %p171 = scmp.le.s32.totalorder 1, %s11
      %p172 = scmp.lt.s32.totalorder %s11, 5
      %p173 = pnand %p171, %p172
      %p174 = pneg %p173
      // Predicated region
      $region25: #{tpu_custom_call.1} parent=5 // pred_check
        _
      $region26: #{tpu_custom_call.1} parent=5 // pred_check_branch
        %176 = sbr.rel (%p173) target = $region28
      $region27: #{tpu_custom_call.1} parent=5 // pred_region
        %s177 = ssub.s32 %s11, 1
        %p178 = scmp.lt.s32.totalorder %s21, 1
        %s179 = scalar_select %p178, %s21, 1
        %p180 = scmp.lt.s32.totalorder %s22, 1
        %s181 = scalar_select %p180, %s22, 1
        %p182 = scmp.lt.s32.totalorder %s23, 0
        %s183 = scalar_select %p182, %s23, 0
        %s184 = smul.addr %s183, 6
        %s185 = smul.addr %s181, 6
        %s186 = sadd.s32 %s184, %s185
        %s187 = smul.addr %s179, 12
        %s188 = sadd.s32 %s186, %s187
        %s189 = smul.addr %s188, 8
        %s190 = scalar_lea.vmem %s0, %s189
        %p191 = pneg %p60
        %p192 = pneg %p57
        %p193 = scmp.lt.s32.totalorder %s21, 1
        %s194 = scalar_select %p193, %s21, 1
        %p195 = scmp.lt.s32.totalorder %s22, 1
        %s196 = scalar_select %p195, %s22, 1
        %p197 = scmp.lt.s32.totalorder %s23, 0
        %s198 = scalar_select %p197, %s23, 0
        %s199 = smul.addr %s198, 2
        %s200 = smul.addr %s196, 2
        %s201 = sadd.s32 %s199, %s200
        %s202 = smul.addr %s194, 4
        %s203 = sadd.s32 %s201, %s202
        %s204 = smul.addr %s203, 4
        %s205 = scalar_lea.vmem %s1, %s204
        %p206 = pneg %p90
        %p207 = pneg %p87
        %p208 = pneg %p120
        %p209 = pneg %p117
        %s210 = sand.u32 %s107, 1
        %s211 = scalar_lea.sflag [#allocation3], %s210
        %s212 = sand.u32 %s107, 1
        %s213 = smul.addr %s212, 32
        %s214 = scalar_lea.vmem [#allocation2], %s213
        %p215 = scmp.lt.s32.totalorder %s21, 1
        %s216 = scalar_select %p215, %s21, 1
        %p217 = scmp.lt.s32.totalorder %s22, 1
        %s218 = scalar_select %p217, %s22, 1
        %p219 = scmp.lt.s32.totalorder %s23, 0
        %s220 = scalar_select %p219, %s23, 0
        %s221 = smul.addr %s220, 6
        %s222 = smul.addr %s218, 6
        %s223 = sadd.s32 %s221, %s222
        %s224 = smul.addr %s216, 12
        %s225 = sadd.s32 %s223, %s224
        %s226 = smul.addr %s225, 8
        %s227 = scalar_lea.vmem %s0, %s226
        %p228 = scmp.lt.s32.totalorder %s21, 1
        %s229 = scalar_select %p228, %s21, 1
        %p230 = scmp.lt.s32.totalorder %s22, 1
        %s231 = scalar_select %p230, %s22, 1
        %p232 = scmp.lt.s32.totalorder %s23, 0
        %s233 = scalar_select %p232, %s23, 0
        %s234 = smul.addr %s233, 2
        %s235 = smul.addr %s231, 2
        %s236 = sadd.s32 %s234, %s235
        %s237 = smul.addr %s229, 4
        %s238 = sadd.s32 %s236, %s237
        %s239 = smul.addr %s238, 4
        %s240 = scalar_lea.vmem %s1, %s239
        %v241 = vld [vmem:[%s227] sm:$0xff]
        %v242 = vld [vmem:[%s227 + $0x8] sm:$0xff]
        %v243 = vld [vmem:[%s227 + $0x10] sm:$0xff]
        %v244 = vld [vmem:[%s227 + $0x18] sm:$0xff]
        %v245 = vld [vmem:[%s227 + $0x20] sm:$0xff]
        %v246 = vld [vmem:[%s227 + $0x28] sm:$0xff]
        %v247 = vld [vmem:[%s240] sm:$0x77]
        %v248 = vlaneseq
        %v249 = vand.u32 %v248, 127
        %v250 = vadd.s32 %v249, 128
        %v251 = vlaneseq
        %v252 = vshrl.u32 %v251, 7
        %v253 = vadd.s32 %v252, 8
        %v254 = vmul.u32 %v252, 16
        %v255 = vmul.u32 %v253, 16
        %vm256 = vcmp.ge.s32.totalorder %v249, %v254
        %vm257 = vcmp.ge.s32.totalorder %v250, %v254
        %vm258 = vcmp.ge.s32.totalorder %v249, %v255
        %vm259 = vcmp.ge.s32.totalorder %v250, %v255
        %v260 = vadd.s32 %v252, 1
        %v261 = vadd.s32 %v253, 1
        %v262 = vmul.u32 %v260, 16
        %v263 = vmul.u32 %v261, 16
        %vm264 = vcmp.lt.s32.totalorder %v249, %v262
        %vm265 = vcmp.lt.s32.totalorder %v250, %v262
        %vm266 = vcmp.lt.s32.totalorder %v249, %v263
        %vm267 = vcmp.lt.s32.totalorder %v250, %v263
        %vm268 = vmand %vm256, %vm264
        %vm269 = vmand %vm257, %vm265
        %vm270 = vmand %vm258, %vm266
        %vm271 = vmand %vm259, %vm267
        %v272 = vsel %vm268, 1, 0
        %v273 = vsel %vm269, 1, 0
        %v274 = vsel %vm270, 1, 0
        %v275 = vsel %vm271, 1, 0
        %v276 = vcvt.s32.f32 %v272
        %v277 = vcvt.s32.f32 %v273
        %v278 = vcvt.s32.f32 %v274
        %v279 = vcvt.s32.f32 %v275
        %vm280 = vcmask 130048
        %v282 = vsel %vm280, %v241, 0
        %v285 = vsel %vm280, %v242, 0
        %v288 = vsel %vm280, %v243, 0
        %v291 = vsel %vm280, %v244, 0
        %v294 = vsel %vm280, %v245, 0
        %v297 = vsel %vm280, %v246, 0
        %299 = vmatprep.subr.mxu0 %v277
        %300 = vmatpush1.msra.mxu0 %v276
        %301 = vmatprep.subr.mxu0 %v279
        %302 = vmatpush1.msra.mxu0 %v278
        %303 = vmatprep.subr.mxu0 0.0
        %304 = vmatpush1.msra.mxu0 0.0
        %305 = vmatprep.subr.mxu0 0.0
        %306 = vmatpush1.msra.mxu0 0.0
        %307 = vmatprep.subr.mxu0 0.0
        %308 = vmatpush1.msra.mxu0 0.0
        %309 = vmatprep.subr.mxu0 0.0
        %310 = vmatpush1.msra.mxu0 0.0
        %311 = vmatprep.subr.mxu0 0.0
        %312 = vmatpush1.msra.mxu0 0.0
        %313 = vmatprep.subr.mxu0 0.0
        %314 = vmatpush1.msra.mxu0 0.0
        %315 = vmatprep.subr.mxu0 0.0
        %316 = vmatpush1.msra.mxu0 0.0
        %317 = vmatprep.subr.mxu0 0.0
        %318 = vmatpush1.msra.mxu0 0.0
        %319 = vmatprep.subr.mxu0 0.0
        %320 = vmatpush1.msra.mxu0 0.0
        %321 = vmatprep.subr.mxu0 0.0
        %322 = vmatpush1.msra.mxu0 0.0
        %323 = vmatprep.subr.mxu0 0.0
        %324 = vmatpush1.msra.mxu0 0.0
        %325 = vmatprep.subr.mxu0 0.0
        %326 = vmatpush1.msra.mxu0 0.0
        %327 = vmatprep.subr.mxu0 0.0
        %328 = vmatpush1.msra.mxu0 0.0
        %329 = vmatprep.subr.mxu0 0.0
        %330 = vmatpush1.msra.mxu0 0.0
        %331 = vmatprep.subr.mxu0 0.0
        %332 = vmatpush1.msra.mxu0 0.0
        %333 = vmatprep.subr.mxu0 0.0
        %334 = vmatpush1.msra.mxu0 0.0
        %335 = vmatprep.subr.mxu0 0.0
        %336 = vmatpush1.msra.mxu0 0.0
        %337 = vmatprep.subr.mxu0 0.0
        %338 = vmatpush1.msra.mxu0 0.0
        %339 = vmatprep.subr.mxu0 0.0
        %340 = vmatpush1.msra.mxu0 0.0
        %341 = vmatprep.subr.mxu0 0.0
        %342 = vmatpush1.msra.mxu0 0.0
        %343 = vmatprep.subr.mxu0 0.0
        %344 = vmatpush1.msra.mxu0 0.0
        %345 = vmatprep.subr.mxu0 0.0
        %346 = vmatpush1.msra.mxu0 0.0
        %347 = vmatprep.subr.mxu0 0.0
        %348 = vmatpush1.msra.mxu0 0.0
        %349 = vmatprep.subr.mxu0 0.0
        %350 = vmatpush1.msra.mxu0 0.0
        %351 = vmatprep.subr.mxu0 0.0
        %352 = vmatpush1.msra.mxu0 0.0
        %353 = vmatprep.subr.mxu0 0.0
        %354 = vmatpush1.msra.mxu0 0.0
        %355 = vmatprep.subr.mxu0 0.0
        %356 = vmatpush1.msra.mxu0 0.0
        %357 = vmatprep.subr.mxu0 0.0
        %358 = vmatpush1.msra.mxu0 0.0
        %359 = vmatprep.subr.mxu0 0.0
        %360 = vmatpush1.msra.mxu0 0.0
        %361 = vmatprep.subr.mxu0 0.0
        %362 = vmatpush1.msra.mxu0 0.0
        %363 = vmatprep.mubr.f32.mxu0 0.0
        %364 = vmatmul.mubr.f32.gmra.mrb[0].mxu0 %v282
        %v365 = vpop.f32.mrb[0].mxu0
        %v366 = vadd.f32 0.0, %v365
        %v367 = vpop.f32.mrb[0].mxu0
        %v368 = vadd.f32 0.0, %v367
        %369 = vmatprep.mubr.f32.mxu0 0.0
        %370 = vmatmul.mubr.f32.gmra.mrb[0].mxu0 %v285
        %v371 = vpop.f32.mrb[0].mxu0
        %v372 = vadd.f32 0.0, %v371
        %v373 = vpop.f32.mrb[0].mxu0
        %v374 = vadd.f32 0.0, %v373
        %375 = vmatprep.mubr.f32.mxu0 0.0
        %376 = vmatmul.mubr.f32.gmra.mrb[0].mxu0 %v288
        %v377 = vpop.f32.mrb[0].mxu0
        %v378 = vadd.f32 0.0, %v377
        %v379 = vpop.f32.mrb[0].mxu0
        %v380 = vadd.f32 0.0, %v379
        %381 = vmatprep.mubr.f32.mxu0 0.0
        %382 = vmatmul.mubr.f32.gmra.mrb[0].mxu0 %v291
        %v383 = vpop.f32.mrb[0].mxu0
        %v384 = vadd.f32 0.0, %v383
        %v385 = vpop.f32.mrb[0].mxu0
        %v386 = vadd.f32 0.0, %v385
        %387 = vmatprep.mubr.f32.mxu0 0.0
        %388 = vmatmul.mubr.f32.gmra.mrb[0].mxu0 %v294
        %v389 = vpop.f32.mrb[0].mxu0
        %v390 = vadd.f32 0.0, %v389
        %v391 = vpop.f32.mrb[0].mxu0
        %v392 = vadd.f32 0.0, %v391
        %393 = vmatprep.mubr.f32.mxu0 0.0
        %394 = vmatmul.mubr.f32.gmra.mrb[0].mxu0 %v297
        %v395 = vpop.f32.mrb[0].mxu0
        %v396 = vadd.f32 0.0, %v395
        %v397 = vpop.f32.mrb[0].mxu0
        %v398 = vadd.f32 0.0, %v397
        %399 = vdwg.mxu0
        %v401 = vlaneseq
        %v402 = vshrl.u32 %v401, 7
        %v403 = vsub.s32 2, %v402
        %v404 = vrot.slane %v247, %v403
        %v405 = vlaneseq
        %v406 = vshrl.u32 %v405, 7
        %v407 = vsub.s32 6, %v406
        %v408 = vrot.slane %v247, %v407
        %v411 = vlaneseq
        %v412 = vshrl.u32 %v411, 7
        %v413 = vsub.s32 2, %v412
        %v414 = vrot.slane %v404, %v413
        %v415 = vlaneseq
        %v416 = vshrl.u32 %v415, 7
        %v417 = vsub.s32 2, %v416
        %v418 = vrot.slane %v408, %v417
        %v419 = vadd.f32 %v390, %v414
        %v420 = vadd.f32 %v392, %v418
        %v421 = vadd.f32 %v396, %v414
        %v422 = vadd.f32 %v398, %v418
        %v423 = vlaneseq
        %v424 = vshrl.u32 %v423, 7
        %v425 = vsub.s32 0, %v424
        %v426 = vrot.slane %v247, %v425
        %v427 = vlaneseq
        %v428 = vshrl.u32 %v427, 7
        %v429 = vsub.s32 4, %v428
        %v430 = vrot.slane %v247, %v429
        %v433 = vlaneseq
        %v434 = vshrl.u32 %v433, 7
        %v435 = vsub.s32 0, %v434
        %v436 = vrot.slane %v426, %v435
        %v437 = vlaneseq
        %v438 = vshrl.u32 %v437, 7
        %v439 = vsub.s32 0, %v438
        %v440 = vrot.slane %v430, %v439
        %v441 = vsub.f32 %v366, %v436
        %v442 = vsub.f32 %v368, %v440
        %v443 = vsub.f32 %v372, %v436
        %v444 = vsub.f32 %v374, %v440
        %v445 = vmul.f32 %v441, %v441
        %v446 = vmul.f32 %v442, %v442
        %v447 = vmul.f32 %v443, %v443
        %v448 = vmul.f32 %v444, %v444
        %v449 = vadd.f32 %v419, %v445
        %v450 = vadd.f32 %v420, %v446
        %v451 = vadd.f32 %v421, %v447
        %v452 = vadd.f32 %v422, %v448
        %v453 = vlaneseq
        %v454 = vshrl.u32 %v453, 7
        %v455 = vsub.s32 1, %v454
        %v456 = vrot.slane %v247, %v455
        %v457 = vlaneseq
        %v458 = vshrl.u32 %v457, 7
        %v459 = vsub.s32 5, %v458
        %v460 = vrot.slane %v247, %v459
        %v463 = vlaneseq
        %v464 = vshrl.u32 %v463, 7
        %v465 = vsub.s32 1, %v464
        %v466 = vrot.slane %v456, %v465
        %v467 = vlaneseq
        %v468 = vshrl.u32 %v467, 7
        %v469 = vsub.s32 1, %v468
        %v470 = vrot.slane %v460, %v469
        %v471 = vsub.f32 %v378, %v466
        %v472 = vsub.f32 %v380, %v470
        %v473 = vsub.f32 %v384, %v466
        %v474 = vsub.f32 %v386, %v470
        %v475 = vmul.f32 %v471, %v471
        %v476 = vmul.f32 %v472, %v472
        %v477 = vmul.f32 %v473, %v473
        %v478 = vmul.f32 %v474, %v474
        %v479 = vadd.f32 %v449, %v475
        %v480 = vadd.f32 %v450, %v476
        %v481 = vadd.f32 %v451, %v477
        %v482 = vadd.f32 %v452, %v478
        %v483 = vmul.f32 %v479, -0.5
        %v484 = vmul.f32 %v480, -0.5
        %v485 = vmul.f32 %v481, -0.5
        %v486 = vmul.f32 %v482, -0.5
        %v487 = vmul.f32 %v483, 1.442695
        %v488 = vpow.pop %v487
        %v489 = vmul.f32 %v484, 1.442695
        %v490 = vpow.pop %v489
        %v491 = vmul.f32 %v485, 1.442695
        %v492 = vpow.pop %v491
        %v493 = vmul.f32 %v486, 1.442695
        %v494 = vpow.pop %v493
        %495 = vst [vmem:[%s214] sm:$0xff] %v488
        %496 = vst [vmem:[%s214 + $0x8] sm:$0xff] %v490
        %497 = vst [vmem:[%s214 + $0x10] sm:$0xff] %v492
        %498 = vst [vmem:[%s214 + $0x18] sm:$0xff] %v494
        %s499 = sand.u32 %s107, 1
        %s500 = scalar_lea.sflag [#allocation3], %s499
        %s501 = sand.u32 %s107, 1
        %s502 = smul.addr %s501, 32
        %s503 = scalar_lea.vmem [#allocation2], %s502
        // Predicated region
        $region29: #{tpu_custom_call.1} parent=27 // pred_check
          %p504 = pneg %p117
        $region30: #{tpu_custom_call.1} parent=27 // pred_check_branch
          %506 = sbr.rel (%p504) target = $region32
        $region31: #{tpu_custom_call.1} parent=27 // pred_region
          %s508 = ssub.s32 512, 512
          %509 = vsyncadd %s500, %s508
          %s510 = smul.addr %s23, 4
          %s511 = smul.addr %s22, 4
          %s512 = sadd.s32 %s510, %s511
          %s513 = smul.addr %s21, 8
          %s514 = sadd.s32 %s512, %s513
          %s515 = smul.addr %s514, 128
          %s516 = scalar_lea.hbm %s2, %s515
          %s517 = sshll.u32 %s503, 4
          %s518 = int_to_ptr.vmem [resolvable:$true] %s517
          %523 = dma.vmem_to_hbm [thread:$0]  %s518, 512, %s516, %s500, 256, 256, 16
        $region32: #{tpu_custom_call.1} parent=27 // pred_fallthru
          _
      $region28: #{tpu_custom_call.1} parent=5 // pred_fallthru
        _
      %p524 = scmp.le.s32.totalorder 2, %s11
      // Predicated region
      $region33: #{tpu_custom_call.1} parent=5 // pred_check
        %p525 = pneg %p524
      $region34: #{tpu_custom_call.1} parent=5 // pred_check_branch
        %527 = sbr.rel (%p525) target = $region36
      $region35: #{tpu_custom_call.1} parent=5 // pred_region
        %s528 = ssub.s32 %s11, 2
        // Predicated region
        $region37: #{tpu_custom_call.1} parent=35 // pred_check
          %p529 = pneg %p123
        $region38: #{tpu_custom_call.1} parent=35 // pred_check_branch
          %531 = sbr.rel (%p529) target = $region40
        $region39: #{tpu_custom_call.1} parent=35 // pred_region
          %s532 = sand.u32 %s108, 1
          %s533 = scalar_lea.sflag [#allocation3], %s532
          %s534 = sand.u32 %s108, 1
          %s535 = smul.addr %s534, 32
          %s536 = scalar_lea.vmem [#allocation2], %s535
          %537 = dma.done %s533, 512
        $region40: #{tpu_custom_call.1} parent=35 // pred_fallthru
          _
      $region36: #{tpu_custom_call.1} parent=5 // pred_fallthru
        _
    $region6: #{tpu_custom_call.1} parent=1 // loop_footer
      %s15 = sadd.s32 1, %s11
    $region7: #{tpu_custom_call.1} parent=1 // loop_footer_branch
      %10 = sbr.rel target = $region3
    $region8: #{tpu_custom_call.1} parent=1 // loop_exit
      _
    %538 = vsyncpa [#allocation3], 1
    %s539 = scalar_lea.sflag [#allocation3], 1
    %540 = vsyncpa %s539, 1

</llo_original>
